<compile_context>
chip_gen: v7x
topology: tpu7x:2x2x1
jax: 0.10.0
libtpu: 0.0.40
codegen_flags: <defaults>
</compile_context>

<pallas_src>
import functools

import jax
import jax.numpy as jnp
from jax import lax
from jax.experimental import pallas as pl
from jax.experimental.pallas import tpu as pltpu


def _round_up(x, m):
    return (x + m - 1) // m * m


def _pick_tile_and_vmem(bt, v, emb_bytes):
    """Largest BT tile such that resident table + buffered tiles fit VMEM."""
    vmem_cap = 48 * 1024 * 1024            # conservative for v7x (64 MiB physical)
    table_cost = 2 * v * v * emb_bytes     # resident (V, V) table, worst-case buffering
    # TODO(synk): fall back to HBM-resident table + double-buffered row gather
    # when the table exceeds the VMEM budget (very large vocab).
    if table_cost > vmem_cap:
        raise NotImplementedError("vocab too large for a VMEM-resident table")

    def cost(t):
        # double-buffered logits output + idx/tgt blocks + f32 intermediates headroom
        return table_cost + t * v * (2 * emb_bytes + 4 * 4) + 4 * t * 8

    tile = min(1024, _round_up(bt, 8))
    while tile > 8 and cost(tile) > vmem_cap:
        tile = _round_up(tile // 2, 8)

    vmem_limit = int(min(vmem_cap, max(32 * 1024 * 1024, cost(tile) + (4 << 20))))
    return tile, vmem_limit


def _train_kernel(idx_ref, tgt_ref, emb_ref, logits_ref, rowloss_ref):
    tile_bt, v = logits_ref.shape
    col = lax.broadcasted_iota(jnp.int32, (tile_bt, v), 1)

    # In-VMEM row gather as one-hot @ table on the MXU.
    one_hot = (col == idx_ref[...]).astype(emb_ref.dtype)          # (tile_bt, V)
    logits_f32 = jnp.dot(one_hot, emb_ref[...],
                         preferred_element_type=jnp.float32)        # (tile_bt, V) f32
    logits_ref[...] = logits_f32.astype(logits_ref.dtype)

    # Fused cross-entropy: per-row (logsumexp - target_logit), reduced in wrapper.
    m = jnp.max(logits_f32, axis=-1, keepdims=True)
    lse = m + jnp.log(jnp.sum(jnp.exp(logits_f32 - m), axis=-1, keepdims=True))
    tgt_logit = jnp.sum(jnp.where(col == tgt_ref[...], logits_f32, 0.0),
                        axis=-1, keepdims=True)
    rowloss_ref[...] = lse - tgt_logit


def _infer_kernel(idx_ref, emb_ref, logits_ref):
    tile_bt, v = logits_ref.shape
    col = lax.broadcasted_iota(jnp.int32, (tile_bt, v), 1)
    one_hot = (col == idx_ref[...]).astype(emb_ref.dtype)
    logits_ref[...] = jnp.dot(one_hot, emb_ref[...],
                              preferred_element_type=jnp.float32
                              ).astype(logits_ref.dtype)


@functools.partial(jax.jit, static_argnames=("with_targets",))
def _bigram_call(idx_flat, tgt_flat, emb, *, with_targets):
    bt = idx_flat.shape[0]
    v = emb.shape[1]
    emb_bytes = jnp.dtype(emb.dtype).itemsize

    tile_bt, vmem_limit = _pick_tile_and_vmem(bt, v, emb_bytes)
    bt_pad = _round_up(bt, tile_bt)
    num_tiles = bt_pad // tile_bt

    # Token ids as a (BT_pad, 1) VMEM block input (padded rows gather row 0
    # and are sliced off / excluded from the loss in the wrapper).
    idx_pad = jnp.zeros((bt_pad, 1), jnp.int32).at[:bt, 0].set(idx_flat)

    cparams = pltpu.CompilerParams(
        dimension_semantics=("parallel",),       # shards across TCs on v7x
        vmem_limit_bytes=vmem_limit,
    )

    if with_targets:
        tgt_pad = jnp.zeros((bt_pad, 1), jnp.int32).at[:bt, 0].set(tgt_flat)
        logits, row_loss = pl.pallas_call(
            _train_kernel,
            out_shape=(
                jax.ShapeDtypeStruct((bt_pad, v), emb.dtype),
                jax.ShapeDtypeStruct((bt_pad, 1), jnp.float32),
            ),
            grid_spec=pl.GridSpec(
                grid=(num_tiles,),
                in_specs=[
                    pl.BlockSpec((tile_bt, 1), lambda i: (i, 0)),   # idx
                    pl.BlockSpec((tile_bt, 1), lambda i: (i, 0)),   # targets
                    pl.BlockSpec((v, v), lambda i: (0, 0)),         # table, VMEM-resident
                ],
                out_specs=(
                    pl.BlockSpec((tile_bt, v), lambda i: (i, 0)),   # logits
                    pl.BlockSpec((tile_bt, 1), lambda i: (i, 0)),   # per-row CE loss
                ),
            ),
            compiler_params=cparams,
        )(idx_pad, tgt_pad, emb)
        loss = jnp.sum(row_loss[:bt, 0].astype(jnp.float32)) / bt
        return logits[:bt], loss

    # Inference path: no targets, no cross-entropy work.
    logits = pl.pallas_call(
        _infer_kernel,
        out_shape=jax.ShapeDtypeStruct((bt_pad, v), emb.dtype),
        grid_spec=pl.GridSpec(
            grid=(num_tiles,),
            in_specs=[
                pl.BlockSpec((tile_bt, 1), lambda i: (i, 0)),       # idx
                pl.BlockSpec((v, v), lambda i: (0, 0)),             # table, VMEM-resident
            ],
            out_specs=pl.BlockSpec((tile_bt, v), lambda i: (i, 0)),
        ),
        compiler_params=cparams,
    )(idx_pad, emb)
    return logits[:bt], None


def bigram_forward(emb, idx, targets=None):
    """Mirror of BiGramModel.forward.

    idx: (B, T) int32, targets: (B, T) int32 or None.
    Returns (logits, loss):
      targets is None  -> logits (B, T, V), loss None
      targets provided -> logits (B*T, V),  loss scalar f32
    """
    B, T = idx.shape
    V = emb.shape[1]
    idx_flat = idx.reshape(B * T).astype(jnp.int32)
    if targets is None:
        logits, _ = _bigram_call(idx_flat, None, emb, with_targets=False)
        return logits.reshape(B, T, V), None
    tgt_flat = targets.reshape(B * T).astype(jnp.int32)
    logits, loss = _bigram_call(idx_flat, tgt_flat, emb, with_targets=True)
    return logits, loss


if __name__ == "__main__":
    # Small deterministic setup.
    vocab_size = 128
    B, T = 2, 8

    key = jax.random.PRNGKey(0)
    k_emb, k_idx, k_tgt = jax.random.split(key, 3)

    # nn.Embedding default init: N(0, 1)
    emb = jax.random.normal(k_emb, (vocab_size, vocab_size), dtype=jnp.float32)
    idx = jax.random.randint(k_idx, (B, T), 0, vocab_size, dtype=jnp.int32)
    targets = jax.random.randint(k_tgt, (B, T), 0, vocab_size, dtype=jnp.int32)

    # Training path (targets provided -> logits (B*T, V) + scalar loss).
    logits, loss = bigram_forward(emb, idx, targets)
    jax.block_until_ready((logits, loss))

    # Reference check in plain JAX.
    ref_logits = emb[idx.reshape(-1)]                        # (B*T, V)
    ref_lse = jax.scipy.special.logsumexp(ref_logits, axis=-1)
    ref_tgt = jnp.take_along_axis(
        ref_logits, targets.reshape(-1, 1), axis=-1)[:, 0]
    ref_loss = jnp.mean(ref_lse - ref_tgt)

    assert logits.shape == (B * T, vocab_size)
    assert jnp.allclose(logits, ref_logits, atol=1e-5), "logits mismatch"
    assert jnp.allclose(loss, ref_loss, atol=1e-5), "loss mismatch"

    # Inference path (targets=None -> logits (B, T, V), loss None).
    logits_nt, loss_nt = bigram_forward(emb, idx, None)
    jax.block_until_ready(logits_nt)
    assert logits_nt.shape == (B, T, vocab_size)
    assert loss_nt is None
    assert jnp.allclose(logits_nt.reshape(B * T, vocab_size),
                        ref_logits, atol=1e-5)

    print("KERNEL_OK")
</pallas_src>

<mosaic_0001>
module attributes {stable_mosaic.version = 11 : i64} {
  func.func @_train_kernel(%arg0: i32, %arg1: memref<16x1xi32, #tpu.memory_space<vmem>>, %arg2: memref<16x1xi32, #tpu.memory_space<vmem>>, %arg3: memref<128x128xf32, #tpu.memory_space<vmem>>, %arg4: memref<16x128xf32, #tpu.memory_space<vmem>>, %arg5: memref<16x1xf32, #tpu.memory_space<vmem>>) attributes {dimension_semantics = [#tpu.dimension_semantics<parallel>], iteration_bounds = array<i64: 1>, scalar_prefetch = 0 : i64, scratch_operands = 0 : i64, tpu.core_type = #tpu.core_type<tc>, window_params = [{transform_indices = @transform_0, window_bounds = array<i64: 16, 1>}, {transform_indices = @transform_1, window_bounds = array<i64: 16, 1>}, {pipeline_mode = #tpu.pipeline_mode<synchronous>, transform_indices = @transform_2, window_bounds = array<i64: 128, 128>}, {transform_indices = @transform_3, window_bounds = array<i64: 16, 128>}, {transform_indices = @transform_4, window_bounds = array<i64: 16, 1>}]} {
    %0 = tpu.iota {dimensions = array<i32: 1>} : vector<16x128xi32>
    %c0 = arith.constant 0 : index
    %c0_0 = arith.constant 0 : index
    %1 = vector.load %arg1[%c0, %c0_0] : memref<16x1xi32, #tpu.memory_space<vmem>>, vector<16x1xi32>
    %2 = vector.broadcast %1 : vector<16x1xi32> to vector<16x128xi32>
    %3 = arith.cmpi eq, %0, %2 : vector<16x128xi32>
    %4 = arith.extui %3 : vector<16x128xi1> to vector<16x128xi32>
    %5 = arith.sitofp %4 : vector<16x128xi32> to vector<16x128xf32>
    %c0_1 = arith.constant 0 : index
    %c0_2 = arith.constant 0 : index
    %6 = vector.load %arg3[%c0_1, %c0_2] : memref<128x128xf32, #tpu.memory_space<vmem>>, vector<128x128xf32>
    %cst = arith.constant dense<0.000000e+00> : vector<16x128xf32>
    %7 = tpu.matmul %5, %6, %cst {dimension_numbers = #tpu.dot_dimension_numbers<[1], [0], [0], [1], [0, 0, 1, 1], [], []>} : vector<16x128xf32>, vector<128x128xf32>, vector<16x128xf32> -> vector<16x128xf32>
    %c0_3 = arith.constant 0 : index
    %c0_4 = arith.constant 0 : index
    %8 = vector.load %arg4[%c0_3, %c0_4] : memref<16x128xf32, #tpu.memory_space<vmem>>, vector<16x128xf32>
    tpu.vector_store %arg4[%c0_3, %c0_4], %7 {strides = array<i32>} : memref<16x128xf32, #tpu.memory_space<vmem>>, vector<16x128xf32>,
    %cst_5 = arith.constant dense<0xFF800000> : vector<16xf32>
    %9 = vector.multi_reduction <maximumf>, %7, %cst_5 [1] : vector<16x128xf32> to vector<16xf32>
    %10 = vector.shape_cast %9 : vector<16xf32> to vector<16x1xf32>
    %11 = vector.broadcast %10 : vector<16x1xf32> to vector<16x128xf32>
    %12 = arith.subf %7, %11 : vector<16x128xf32>
    %13 = math.exp %12 : vector<16x128xf32>
    %cst_6 = arith.constant dense<0.000000e+00> : vector<16xf32>
    %14 = vector.multi_reduction <add>, %13, %cst_6 [1] : vector<16x128xf32> to vector<16xf32>
    %15 = vector.shape_cast %14 : vector<16xf32> to vector<16x1xf32>
    %16 = math.log %15 : vector<16x1xf32>
    %17 = arith.addf %10, %16 : vector<16x1xf32>
    %c0_7 = arith.constant 0 : index
    %c0_8 = arith.constant 0 : index
    %18 = vector.load %arg2[%c0_7, %c0_8] : memref<16x1xi32, #tpu.memory_space<vmem>>, vector<16x1xi32>
    %19 = vector.broadcast %18 : vector<16x1xi32> to vector<16x128xi32>
    %20 = arith.cmpi eq, %0, %19 : vector<16x128xi32>
    %cst_9 = arith.constant 0.000000e+00 : f32
    %21 = vector.broadcast %cst_9 : f32 to vector<16x128xf32>
    %22 = arith.select %20, %7, %21 : vector<16x128xi1>, vector<16x128xf32>
    %cst_10 = arith.constant dense<0.000000e+00> : vector<16xf32>
    %23 = vector.multi_reduction <add>, %22, %cst_10 [1] : vector<16x128xf32> to vector<16xf32>
    %24 = vector.shape_cast %23 : vector<16xf32> to vector<16x1xf32>
    %25 = arith.subf %17, %24 : vector<16x1xf32>
    %c0_11 = arith.constant 0 : index
    %c0_12 = arith.constant 0 : index
    %26 = vector.load %arg5[%c0_11, %c0_12] : memref<16x1xf32, #tpu.memory_space<vmem>>, vector<16x1xf32>
    tpu.vector_store %arg5[%c0_11, %c0_12], %25 {strides = array<i32>} : memref<16x1xf32, #tpu.memory_space<vmem>>, vector<16x1xf32>,
    return
  }
  func.func @transform_0(%arg0: i32) -> (i32, i32) {
    %c0_i32 = arith.constant 0 : i32
    %c0_i32_0 = arith.constant 0 : i32
    return %arg0, %c0_i32 : i32, i32
  }
  func.func @transform_1(%arg0: i32) -> (i32, i32) {
    %c0_i32 = arith.constant 0 : i32
    %c0_i32_0 = arith.constant 0 : i32
    return %arg0, %c0_i32 : i32, i32
  }
  func.func @transform_2(%arg0: i32) -> (i32, i32) {
    %c0_i32 = arith.constant 0 : i32
    %c0_i32_0 = arith.constant 0 : i32
    %c0_i32_1 = arith.constant 0 : i32
    return %c0_i32, %c0_i32_0 : i32, i32
  }
  func.func @transform_3(%arg0: i32) -> (i32, i32) {
    %c0_i32 = arith.constant 0 : i32
    %c0_i32_0 = arith.constant 0 : i32
    return %arg0, %c0_i32 : i32, i32
  }
  func.func @transform_4(%arg0: i32) -> (i32, i32) {
    %c0_i32 = arith.constant 0 : i32
    %c0_i32_0 = arith.constant 0 : i32
    return %arg0, %c0_i32 : i32, i32
  }
}

</mosaic_0001>

<llo_original>
// kernel: _bigram_call.1
$region0: #{_bigram_call.1}
  #allocation0 [shape = 'u32[]', space=smem, size = 0x4, offset = 0x4, fixed_abs, tag = 'smem constant byte address 0x4 - core index']
  #allocation1 [shape = 'u32[144,128]{1,0:T(1,128)}', space=vmem, size = 0x12000, scoped, tag = 'internal scratch']
  %s0 = inlined_call_operand.vmem [shape: s32[16,1], index: 0, kind: input, shape index: {}]
  %s1 = inlined_call_operand.vmem [shape: s32[16,1], index: 1, kind: input, shape index: {}]
  %s2 = inlined_call_operand.hbm [shape: f32[128,128], index: 2, kind: input, shape index: {}]
  %s3 = inlined_call_operand.hbm [shape: f32[16,128], index: 3, kind: output, shape index: {0}]
  %s4 = inlined_call_operand.vmem [shape: f32[16,1], index: 4, kind: output, shape index: {1}]
  %5 = xla_tuple %s3, %s4
  %s6 = sld [smem:[#allocation0]]
  $region34: #{_bigram_call.1} parent=0
    _
  %s8 = ssub.s32 1, %s6
  %s9 = scalar_select 0, %s8, %s6
  $region1: #{_bigram_call.1} parent=0
    #allocation2 [shape = 'u8[65536]{0}', space=vmem, size = 0x10000, scoped, tag = 'input window, operand 2, single buffered']
    #allocation3 [shape = 's32[1]{0}', space=sflag, size = 0x4, scoped, tag = 'scoped memory for _bigram_call.1']
    #allocation4 [shape = 's32[1]{0}', space=sflag, size = 0x4, scoped, tag = 'scoped memory for _bigram_call.1']
    #allocation5 [shape = 'u8[8192]{0}', space=vmem, size = 0x2000, scoped, tag = 'output window, operand 0, single buffered']
    %10 = vsyncpa [#allocation3], 0
    %11 = vsyncpa [#allocation4], 0
    // Predicated region
    $region2: #{_bigram_call.1} parent=1 // pred_check
      _
    $region3: #{_bigram_call.1} parent=1 // pred_check_branch
      %13 = sbr.rel (0) target = $region5
    $region4: #{_bigram_call.1} parent=1 // pred_region
      _
    $region5: #{_bigram_call.1} parent=1 // pred_fallthru
      _
    // Predicated region
    $region6: #{_bigram_call.1} parent=1 // pred_check
      _
    $region7: #{_bigram_call.1} parent=1 // pred_check_branch
      %15 = sbr.rel (0) target = $region9
    $region8: #{_bigram_call.1} parent=1 // pred_region
      _
    $region9: #{_bigram_call.1} parent=1 // pred_fallthru
      _
    // Predicated region
    $region10: #{_bigram_call.1} parent=1 // pred_check
      _
    $region11: #{_bigram_call.1} parent=1 // pred_check_branch
      %17 = sbr.rel (0) target = $region13
    $region12: #{_bigram_call.1} parent=1 // pred_region
      %s19 = ssub.s32 2048, 2048
      %20 = vsyncadd [#allocation3], %s19
      %s21 = sshll.u32 [#allocation2], 4
      %s22 = int_to_ptr.vmem [resolvable:$true] %s21
      %27 = dma.hbm_to_vmem [thread:$0]  %s2, 2048, %s22, [#allocation3], 128, 128, 8
    $region13: #{_bigram_call.1} parent=1 // pred_fallthru
      _
    // Predicated region
    $region14: #{_bigram_call.1} parent=1 // pred_check
      _
    $region15: #{_bigram_call.1} parent=1 // pred_check_branch
      %29 = sbr.rel (0) target = $region17
    $region16: #{_bigram_call.1} parent=1 // pred_region
      %30 = dma.done [#allocation3], 2048
    $region17: #{_bigram_call.1} parent=1 // pred_fallthru
      _
    %v31 = vlaneseq
    %v32 = vand.u32 %v31, 127
    %v33 = vld [vmem:[%s0] sm:$0xff]
    %v34 = vld [vmem:[%s0 + $0x8] sm:$0xff]
    %35 = vset.pattern.permute.xlu0 0
    %36 = vperm.xlu0 %35, %v33
    %v37 = vpop.permute.xlu0 %36
    %38 = vset.pattern.permute.xlu0 0
    %39 = vperm.xlu0 %38, %v34
    %v40 = vpop.permute.xlu0 %39
    %vm41 = vcmp.eq.s32.totalorder %v32, %v37
    %vm42 = vcmp.eq.s32.totalorder %v32, %v40
    %v43 = vsel %vm41, 1, 0
    %v44 = vsel %vm42, 1, 0
    %v45 = vcvt.s32.f32 %v43
    %v46 = vcvt.s32.f32 %v44
    %v47 = vld [vmem:[#allocation2] sm:$0xff]
    %v48 = vld [vmem:[#allocation2 + $0x8] sm:$0xff]
    %v49 = vld [vmem:[#allocation2 + $0x10] sm:$0xff]
    %v50 = vld [vmem:[#allocation2 + $0x18] sm:$0xff]
    %v51 = vld [vmem:[#allocation2 + $0x20] sm:$0xff]
    %v52 = vld [vmem:[#allocation2 + $0x28] sm:$0xff]
    %v53 = vld [vmem:[#allocation2 + $0x30] sm:$0xff]
    %v54 = vld [vmem:[#allocation2 + $0x38] sm:$0xff]
    %v55 = vld [vmem:[#allocation2 + $0x40] sm:$0xff]
    %v56 = vld [vmem:[#allocation2 + $0x48] sm:$0xff]
    %v57 = vld [vmem:[#allocation2 + $0x50] sm:$0xff]
    %v58 = vld [vmem:[#allocation2 + $0x58] sm:$0xff]
    %v59 = vld [vmem:[#allocation2 + $0x60] sm:$0xff]
    %v60 = vld [vmem:[#allocation2 + $0x68] sm:$0xff]
    %v61 = vld [vmem:[#allocation2 + $0x70] sm:$0xff]
    %v62 = vld [vmem:[#allocation2 + $0x78] sm:$0xff]
    %63 = vmatprep.subr.mxu0 0.0
    %64 = vmatpush1.msra.mxu0 %v47
    %65 = vmatprep.subr.mxu0 0.0
    %66 = vmatpush1.msra.mxu0 %v48
    %67 = vmatprep.subr.mxu0 0.0
    %68 = vmatpush1.msra.mxu0 %v49
    %69 = vmatprep.subr.mxu0 0.0
    %70 = vmatpush1.msra.mxu0 %v50
    %71 = vmatprep.subr.mxu0 0.0
    %72 = vmatpush1.msra.mxu0 %v51
    %73 = vmatprep.subr.mxu0 0.0
    %74 = vmatpush1.msra.mxu0 %v52
    %75 = vmatprep.subr.mxu0 0.0
    %76 = vmatpush1.msra.mxu0 %v53
    %77 = vmatprep.subr.mxu0 0.0
    %78 = vmatpush1.msra.mxu0 %v54
    %79 = vmatprep.subr.mxu0 0.0
    %80 = vmatpush1.msra.mxu0 %v55
    %81 = vmatprep.subr.mxu0 0.0
    %82 = vmatpush1.msra.mxu0 %v56
    %83 = vmatprep.subr.mxu0 0.0
    %84 = vmatpush1.msra.mxu0 %v57
    %85 = vmatprep.subr.mxu0 0.0
    %86 = vmatpush1.msra.mxu0 %v58
    %87 = vmatprep.subr.mxu0 0.0
    %88 = vmatpush1.msra.mxu0 %v59
    %89 = vmatprep.subr.mxu0 0.0
    %90 = vmatpush1.msra.mxu0 %v60
    %91 = vmatprep.subr.mxu0 0.0
    %92 = vmatpush1.msra.mxu0 %v61
    %93 = vmatprep.subr.mxu0 0.0
    %94 = vmatpush1.msra.mxu0 %v62
    %95 = vmatprep.subr.mxu0 0.0
    %96 = vmatpush1.msra.mxu0 0.0
    %97 = vmatprep.subr.mxu0 0.0
    %98 = vmatpush1.msra.mxu0 0.0
    %99 = vmatprep.subr.mxu0 0.0
    %100 = vmatpush1.msra.mxu0 0.0
    %101 = vmatprep.subr.mxu0 0.0
    %102 = vmatpush1.msra.mxu0 0.0
    %103 = vmatprep.subr.mxu0 0.0
    %104 = vmatpush1.msra.mxu0 0.0
    %105 = vmatprep.subr.mxu0 0.0
    %106 = vmatpush1.msra.mxu0 0.0
    %107 = vmatprep.subr.mxu0 0.0
    %108 = vmatpush1.msra.mxu0 0.0
    %109 = vmatprep.subr.mxu0 0.0
    %110 = vmatpush1.msra.mxu0 0.0
    %111 = vmatprep.subr.mxu0 0.0
    %112 = vmatpush1.msra.mxu0 0.0
    %113 = vmatprep.subr.mxu0 0.0
    %114 = vmatpush1.msra.mxu0 0.0
    %115 = vmatprep.subr.mxu0 0.0
    %116 = vmatpush1.msra.mxu0 0.0
    %117 = vmatprep.subr.mxu0 0.0
    %118 = vmatpush1.msra.mxu0 0.0
    %119 = vmatprep.subr.mxu0 0.0
    %120 = vmatpush1.msra.mxu0 0.0
    %121 = vmatprep.subr.mxu0 0.0
    %122 = vmatpush1.msra.mxu0 0.0
    %123 = vmatprep.subr.mxu0 0.0
    %124 = vmatpush1.msra.mxu0 0.0
    %125 = vmatprep.subr.mxu0 0.0
    %126 = vmatpush1.msra.mxu0 0.0
    %127 = vmatprep.mubr.f32.mxu0 0.0
    %128 = vmatmul.mubr.f32.gmra.mrb[0].mxu0 %v45
    %v129 = vpop.f32.mrb[0].mxu0
    %v130 = vadd.f32 0.0, %v129
    %v131 = vpop.f32.mrb[0].mxu0
    %132 = vmatprep.mubr.f32.mxu0 0.0
    %133 = vmatmul.mubr.f32.gmra.mrb[0].mxu0 %v46
    %v134 = vpop.f32.mrb[0].mxu0
    %v135 = vadd.f32 0.0, %v134
    %v136 = vpop.f32.mrb[0].mxu0
    %137 = vdwg.mxu0
    %138 = vst [vmem:[#allocation5] sm:$0xff] %v130
    %139 = vst [vmem:[#allocation5 + $0x8] sm:$0xff] %v135
    %140 = vmax.xlane.f32.xlu0 %v130
    %v141 = vpop.xlane.xlu0 %140
    %142 = vmax.xlane.f32.xlu0 %v135
    %v143 = vpop.xlane.xlu0 %142
    %v144 = vsub.f32 %v130, %v141
    %v145 = vsub.f32 %v135, %v143
    %v146 = vmul.f32 %v144, 1.442695
    %v147 = vpow.pop %v146
    %v148 = vmul.f32 %v145, 1.442695
    %v149 = vpow.pop %v148
    %150 = vadd.xlane.f32.xlu0 %v147
    %v151 = vpop.xlane.xlu0 %150
    %152 = vadd.xlane.f32.xlu0 %v149
    %v153 = vpop.xlane.xlu0 %152
    %v154 = vlog2.pop %v151
    %v155 = vmul.f32 %v154, 0.6931472
    %v156 = vlog2.pop %v153
    %v157 = vmul.f32 %v156, 0.6931472
    %v158 = vadd.f32 %v141, %v155
    %v159 = vadd.f32 %v143, %v157
    %v160 = vld [vmem:[%s1] sm:$0xff]
    %v161 = vld [vmem:[%s1 + $0x8] sm:$0xff]
    %162 = vset.pattern.permute.xlu0 0
    %163 = vperm.xlu0 %162, %v160
    %v164 = vpop.permute.xlu0 %163
    %165 = vset.pattern.permute.xlu0 0
    %166 = vperm.xlu0 %165, %v161
    %v167 = vpop.permute.xlu0 %166
    %vm168 = vcmp.eq.s32.totalorder %v32, %v164
    %vm169 = vcmp.eq.s32.totalorder %v32, %v167
    %v170 = vsel %vm168, %v130, 0.0
    %v171 = vsel %vm169, %v135, 0.0
    %172 = vadd.xlane.f32.xlu0 %v170
    %v173 = vpop.xlane.xlu0 %172
    %174 = vadd.xlane.f32.xlu0 %v171
    %v175 = vpop.xlane.xlu0 %174
    %v176 = vsub.f32 %v158, %v173
    %v177 = vsub.f32 %v159, %v175
    %vm178 = vcmask 7168
    %179 = vst.msk [vmem:[%s4] sm:$0xff] %vm178, %v176
    %180 = vst.msk [vmem:[%s4 + $0x8] sm:$0xff] %vm178, %v177
    // Predicated region
    $region18: #{_bigram_call.1} parent=1 // pred_check
      _
    $region19: #{_bigram_call.1} parent=1 // pred_check_branch
      %182 = sbr.rel (0) target = $region21
    $region20: #{_bigram_call.1} parent=1 // pred_region
      %s184 = ssub.s32 256, 256
      %185 = vsyncadd [#allocation4], %s184
      %s186 = sshll.u32 [#allocation5], 4
      %s187 = int_to_ptr.vmem [resolvable:$true] %s186
      %192 = dma.vmem_to_hbm [thread:$0]  %s187, 256, %s3, [#allocation4], 128, 128, 8
    $region21: #{_bigram_call.1} parent=1 // pred_fallthru
      _
    // Predicated region
    $region22: #{_bigram_call.1} parent=1 // pred_check
      _
    $region23: #{_bigram_call.1} parent=1 // pred_check_branch
      %194 = sbr.rel (0) target = $region25
    $region24: #{_bigram_call.1} parent=1 // pred_region
      _
    $region25: #{_bigram_call.1} parent=1 // pred_fallthru
      _
    // Predicated region
    $region26: #{_bigram_call.1} parent=1 // pred_check
      _
    $region27: #{_bigram_call.1} parent=1 // pred_check_branch
      %196 = sbr.rel (0) target = $region29
    $region28: #{_bigram_call.1} parent=1 // pred_region
      %197 = dma.done [#allocation4], 256
    $region29: #{_bigram_call.1} parent=1 // pred_fallthru
      _
    // Predicated region
    $region30: #{_bigram_call.1} parent=1 // pred_check
      _
    $region31: #{_bigram_call.1} parent=1 // pred_check_branch
      %199 = sbr.rel (0) target = $region33
    $region32: #{_bigram_call.1} parent=1 // pred_region
      _
    $region33: #{_bigram_call.1} parent=1 // pred_fallthru
      _
    %200 = vsyncpa [#allocation3], 1
    %201 = vsyncpa [#allocation4], 1

</llo_original>
